<compile_context>
chip_gen: v7x
topology: tpu7x:2x2x1
jax: 0.10.0
libtpu: 0.0.40
codegen_flags: <defaults>
</compile_context>

<pallas_src>
import functools
import math

import jax
import jax.numpy as jnp
import numpy as np
from jax import lax
from jax.experimental import pallas as pl
from jax.experimental.pallas import tpu as pltpu


# ---------------------------------------------------------------------------
# Kernel
# ---------------------------------------------------------------------------

def _rotary_kernel(cos_ref, sin_ref, q_ref, k_ref, qo_ref, ko_ref):
    """Interleaved-pair complex rotary multiply.

    cos_ref / sin_ref: (tile_sq, 1, C) f32, duplicated per complex pair along C;
                       sin already carries the -/+ sign for even/odd lanes.
    q_ref / k_ref / qo_ref / ko_ref: (tile_sq, R, C), interleaved (real, imag).
    """
    cos = cos_ref[...]                      # (tile_sq, 1, C) -> broadcast over R
    sin = sin_ref[...]
    n_lanes = q_ref.shape[-1]

    # Lane parity: even lanes hold real parts, odd lanes imaginary parts.
    lane = lax.broadcasted_iota(jnp.int32, q_ref.shape, 2)
    is_even = (lane % 2) == 0

    def rotate(x_ref, o_ref):
        x = x_ref[...].astype(jnp.float32)
        # Partner of each lane inside its (real, imag) pair:
        #   even lane j -> x[j + 1]   (roll by C-1 == roll by -1)
        #   odd  lane j -> x[j - 1]   (roll by +1)
        partner = jnp.where(
            is_even,
            pltpu.roll(x, n_lanes - 1, axis=2),
            pltpu.roll(x, 1, axis=2),
        )
        # out[2k]   = x[2k]*cos[k]   + x[2k+1]*(-sin[k])
        # out[2k+1] = x[2k+1]*cos[k] + x[2k]  *(+sin[k])
        o_ref[...] = (x * cos + partner * sin).astype(o_ref.dtype)

    rotate(q_ref, qo_ref)
    rotate(k_ref, ko_ref)


# ---------------------------------------------------------------------------
# Rotary tables (matches torch precompute_freqs_cis; sign folded into sin)
# ---------------------------------------------------------------------------

@functools.lru_cache(maxsize=16)
def _rotary_tables(sq: int, hh: int, group: int, base: float):
    d2 = hh // 2
    inv_freq = 1.0 / (base ** (np.arange(0, hh, 2, dtype=np.float32)[:d2] / hh))
    t = np.arange(sq, dtype=np.float32)
    freqs = np.outer(t, inv_freq)                                    # (sq, d2)
    cos = np.cos(freqs)
    sin = np.sin(freqs)
    cos_dup = np.repeat(cos, 2, axis=1)                              # (sq, hh)
    sin_signed = np.stack([-sin, sin], axis=-1).reshape(sq, hh)      # (sq, hh)
    # Tile over the `group` heads folded into the lane axis; keep a unit row
    # axis so the kernel broadcasts over R without any in-kernel reshape.
    lanes = group * hh
    cos_t = np.tile(cos_dup, (1, group)).reshape(sq, 1, lanes)
    sin_t = np.tile(sin_signed, (1, group)).reshape(sq, 1, lanes)
    return jnp.asarray(cos_t), jnp.asarray(sin_t)


# ---------------------------------------------------------------------------
# Layout / tiling heuristics
# ---------------------------------------------------------------------------

_LANE = 128
_SUBLANE = 8
_VMEM_TILE_BUDGET = 20 * 1024 * 1024   # double-buffered tile bytes per grid step
_VMEM_LIMIT = 32 * 1024 * 1024         # safe scoped limit on v5e / v6e / v7x


def _divisors(n: int):
    out = set()
    for d in range(1, int(math.isqrt(n)) + 1):
        if n % d == 0:
            out.add(d)
            out.add(n // d)
    return sorted(out)


def _choose_head_group(bnh: int, hh: int) -> int:
    """Smallest number of (batch*head) rows folded into the lane axis so that
    the lane width (group*hh) is a multiple of 128 (lane-dense stores)."""
    for g in range(1, bnh + 1):
        if bnh % g == 0 and (g * hh) % _LANE == 0:
            return g
    return 1   # no lane-dense grouping possible; keep rows wide instead


def _choose_tile_sq(sq: int, rows: int, lanes: int, itemsize: int) -> int:
    """Largest divisor of sq whose double-buffered footprint fits the VMEM
    budget (accounting for sublane/lane padding), preferring >=2 grid steps."""
    packing = max(1, 4 // itemsize)
    rows_pad = -(-rows // (_SUBLANE * packing)) * (_SUBLANE * packing)
    lanes_pad = -(-lanes // _LANE) * _LANE
    x_row = rows_pad * lanes_pad * itemsize          # one q/k tile, per sq row
    t_row = _SUBLANE * lanes_pad * 4                 # one cos/sin tile, per sq row
    per_row = 2 * (4 * x_row + 2 * t_row)            # 2x buffers: q,k in+out + tables
    cap = max(1, _VMEM_TILE_BUDGET // per_row)
    fitting = [d for d in _divisors(sq) if d <= cap] or [1]
    tile = max(fitting)
    if tile == sq and sq > 1:
        smaller = [d for d in fitting if d < sq]
        if smaller:                                  # >=2 steps -> both v7x TCs busy
            tile = max(smaller)
    return tile


# ---------------------------------------------------------------------------
# Public wrapper
# ---------------------------------------------------------------------------

def rotary_embedding_complex(query, key, base=10000.0):
    """query/key: (sq, b, nh, hh); returns rotated (sq, b, nh, hh) tensors.

    Equivalent to RotaryEmbeddingComplex.forward with dimensions=hh,
    max_seq_length=sq, base=base and position_ids=None.
    """
    # TODO(synk): query_position_ids / key_position_ids gather path not implemented
    # (this is the `position_ids is None` broadcast path of the module).
    sq, b, nh, hh = query.shape
    assert key.shape == query.shape
    assert hh % 2 == 0 and hh > 1

    bnh = b * nh
    group = _choose_head_group(bnh, hh)
    lanes = group * hh           # C: lane axis, multiple of 128 when possible
    rows = bnh // group          # R: second-minor axis
    itemsize = query.dtype.itemsize

    # Free reshapes (contiguous merges): pairs stay adjacent along the lane axis.
    q2 = query.reshape(sq, rows, lanes)
    k2 = key.reshape(sq, rows, lanes)

    cos_t, sin_t = _rotary_tables(sq, hh, group, float(base))   # (sq, 1, lanes) f32

    tile_sq = _choose_tile_sq(sq, rows, lanes, itemsize)
    grid = (sq // tile_sq,)

    x_spec = pl.BlockSpec((tile_sq, rows, lanes), lambda i: (i, 0, 0))
    t_spec = pl.BlockSpec((tile_sq, 1, lanes), lambda i: (i, 0, 0))

    n = q2.size
    cost = pl.CostEstimate(
        flops=8 * n,
        transcendentals=0,
        bytes_accessed=4 * n * itemsize + 2 * cos_t.size * 4,
    )

    qo, ko = pl.pallas_call(
        _rotary_kernel,
        out_shape=(
            jax.ShapeDtypeStruct(q2.shape, query.dtype),
            jax.ShapeDtypeStruct(k2.shape, key.dtype),
        ),
        grid_spec=pltpu.PrefetchScalarGridSpec(
            num_scalar_prefetch=0,
            grid=grid,
            in_specs=[t_spec, t_spec, x_spec, x_spec],
            out_specs=(x_spec, x_spec),
        ),
        compiler_params=pltpu.CompilerParams(
            dimension_semantics=("parallel",),
            vmem_limit_bytes=_VMEM_LIMIT,
        ),
        cost_estimate=cost,
        # NOTE: input_output_aliases={2: 0, 3: 1} would enable in-place update /
        # buffer donation; left off so callers' q/k arrays remain valid.
    )(cos_t, sin_t, q2, k2)

    return qo.reshape(sq, b, nh, hh), ko.reshape(sq, b, nh, hh)


# ---------------------------------------------------------------------------
# Pure-JAX reference (mirrors apply_complex_rotary_emb, position_ids=None)
# ---------------------------------------------------------------------------

def _rotary_reference(x, base=10000.0):
    sq, b, nh, hh = x.shape
    d2 = hh // 2
    inv_freq = 1.0 / (base ** (np.arange(0, hh, 2, dtype=np.float32)[:d2] / hh))
    freqs = np.outer(np.arange(sq, dtype=np.float32), inv_freq)
    cos = jnp.asarray(np.cos(freqs))
    sin = jnp.asarray(np.sin(freqs))
    xr = x.astype(jnp.float32).reshape(sq, b, nh, d2, 2)
    xe, xo = xr[..., 0], xr[..., 1]
    c = cos[:, None, None, :]
    s = sin[:, None, None, :]
    oe = xe * c - xo * s
    oo = xe * s + xo * c
    return jnp.stack([oe, oo], axis=-1).reshape(sq, b, nh, hh).astype(x.dtype)


if __name__ == "__main__":
    # Module config implied: dimensions=hh, max_seq_length=sq, base=10000.0.
    sq, b, nh, hh = 8, 2, 4, 32
    k0 = jax.random.PRNGKey(0)
    kq, kk = jax.random.split(k0)
    query = jax.random.normal(kq, (sq, b, nh, hh), dtype=jnp.float32)
    key_t = jax.random.normal(kk, (sq, b, nh, hh), dtype=jnp.float32)

    q_out, k_out = rotary_embedding_complex(query, key_t)
    q_out = jax.block_until_ready(q_out)
    k_out = jax.block_until_ready(k_out)

    q_ref = _rotary_reference(query)
    k_ref = _rotary_reference(key_t)

    np.testing.assert_allclose(np.asarray(q_out), np.asarray(q_ref), rtol=1e-5, atol=1e-5)
    np.testing.assert_allclose(np.asarray(k_out), np.asarray(k_ref), rtol=1e-5, atol=1e-5)
    assert q_out.shape == (sq, b, nh, hh) and k_out.shape == (sq, b, nh, hh)

    print("KERNEL_OK")
</pallas_src>

<mosaic_0001>
module attributes {stable_mosaic.version = 11 : i64} {
  func.func @_rotary_kernel(%arg0: i32, %arg1: memref<4x1x128xf32, #tpu.memory_space<vmem>>, %arg2: memref<4x1x128xf32, #tpu.memory_space<vmem>>, %arg3: memref<4x2x128xf32, #tpu.memory_space<vmem>>, %arg4: memref<4x2x128xf32, #tpu.memory_space<vmem>>, %arg5: memref<4x2x128xf32, #tpu.memory_space<vmem>>, %arg6: memref<4x2x128xf32, #tpu.memory_space<vmem>>) attributes {dimension_semantics = [#tpu.dimension_semantics<parallel>], iteration_bounds = array<i64: 2>, scalar_prefetch = 0 : i64, scratch_operands = 0 : i64, tpu.core_type = #tpu.core_type<tc>, window_params = [{transform_indices = @transform_0, window_bounds = array<i64: 4, 1, 128>}, {transform_indices = @transform_1, window_bounds = array<i64: 4, 1, 128>}, {transform_indices = @transform_2, window_bounds = array<i64: 4, 2, 128>}, {transform_indices = @transform_3, window_bounds = array<i64: 4, 2, 128>}, {transform_indices = @transform_4, window_bounds = array<i64: 4, 2, 128>}, {transform_indices = @transform_5, window_bounds = array<i64: 4, 2, 128>}]} {
    %c0 = arith.constant 0 : index
    %c0_0 = arith.constant 0 : index
    %c0_1 = arith.constant 0 : index
    %0 = vector.load %arg1[%c0, %c0_0, %c0_1] : memref<4x1x128xf32, #tpu.memory_space<vmem>>, vector<4x1x128xf32>
    %c0_2 = arith.constant 0 : index
    %c0_3 = arith.constant 0 : index
    %c0_4 = arith.constant 0 : index
    %1 = vector.load %arg2[%c0_2, %c0_3, %c0_4] : memref<4x1x128xf32, #tpu.memory_space<vmem>>, vector<4x1x128xf32>
    %2 = tpu.iota {dimensions = array<i32: 2>} : vector<4x2x128xi32>
    %c2_i32 = arith.constant 2 : i32
    %c0_i32 = arith.constant 0 : i32
    %3 = arith.cmpi eq, %c2_i32, %c0_i32 : i32
    %c1_i32 = arith.constant 1 : i32
    %4 = arith.select %3, %c1_i32, %c2_i32 : i32
    %5 = vector.broadcast %4 : i32 to vector<4x2x128xi32>
    %6 = arith.remsi %2, %5 : vector<4x2x128xi32>
    %c0_i32_5 = arith.constant 0 : i32
    %7 = vector.broadcast %c0_i32_5 : i32 to vector<4x2x128xi32>
    %8 = arith.cmpi ne, %6, %7 : vector<4x2x128xi32>
    %c0_i32_6 = arith.constant 0 : i32
    %9 = vector.broadcast %c0_i32_6 : i32 to vector<4x2x128xi32>
    %10 = arith.cmpi slt, %6, %9 : vector<4x2x128xi32>
    %c0_i32_7 = arith.constant 0 : i32
    %11 = arith.cmpi slt, %4, %c0_i32_7 : i32
    %12 = vector.broadcast %11 : i1 to vector<4x2x128xi1>
    %13 = vector.broadcast %12 : vector<4x2x128xi1> to vector<4x2x128xi1>
    %14 = arith.xori %10, %13 : vector<4x2x128xi1>
    %15 = arith.andi %14, %8 : vector<4x2x128xi1>
    %16 = vector.broadcast %4 : i32 to vector<4x2x128xi32>
    %17 = arith.addi %6, %16 : vector<4x2x128xi32>
    %18 = arith.select %15, %17, %6 : vector<4x2x128xi1>, vector<4x2x128xi32>
    %c0_i32_8 = arith.constant 0 : i32
    %19 = vector.broadcast %c0_i32_8 : i32 to vector<4x2x128xi32>
    %20 = arith.cmpi eq, %18, %19 : vector<4x2x128xi32>
    %c0_9 = arith.constant 0 : index
    %c0_10 = arith.constant 0 : index
    %c0_11 = arith.constant 0 : index
    %21 = vector.load %arg3[%c0_9, %c0_10, %c0_11] : memref<4x2x128xf32, #tpu.memory_space<vmem>>, vector<4x2x128xf32>
    %c127_i32 = arith.constant 127 : i32
    %22 = tpu.dynamic_rotate %21 by %c127_i32 dim 2 : vector<4x2x128xf32>, i32 -> vector<4x2x128xf32>
    %c1_i32_12 = arith.constant 1 : i32
    %23 = tpu.dynamic_rotate %21 by %c1_i32_12 dim 2 : vector<4x2x128xf32>, i32 -> vector<4x2x128xf32>
    %24 = arith.select %20, %22, %23 : vector<4x2x128xi1>, vector<4x2x128xf32>
    %25 = vector.broadcast %0 : vector<4x1x128xf32> to vector<4x2x128xf32>
    %26 = arith.mulf %21, %25 : vector<4x2x128xf32>
    %27 = vector.broadcast %1 : vector<4x1x128xf32> to vector<4x2x128xf32>
    %28 = arith.mulf %24, %27 : vector<4x2x128xf32>
    %29 = arith.addf %26, %28 : vector<4x2x128xf32>
    %c0_13 = arith.constant 0 : index
    %c0_14 = arith.constant 0 : index
    %c0_15 = arith.constant 0 : index
    %30 = vector.load %arg5[%c0_13, %c0_14, %c0_15] : memref<4x2x128xf32, #tpu.memory_space<vmem>>, vector<4x2x128xf32>
    tpu.vector_store %arg5[%c0_13, %c0_14, %c0_15], %29 {strides = array<i32>} : memref<4x2x128xf32, #tpu.memory_space<vmem>>, vector<4x2x128xf32>,
    %c0_16 = arith.constant 0 : index
    %c0_17 = arith.constant 0 : index
    %c0_18 = arith.constant 0 : index
    %31 = vector.load %arg4[%c0_16, %c0_17, %c0_18] : memref<4x2x128xf32, #tpu.memory_space<vmem>>, vector<4x2x128xf32>
    %c127_i32_19 = arith.constant 127 : i32
    %32 = tpu.dynamic_rotate %31 by %c127_i32_19 dim 2 : vector<4x2x128xf32>, i32 -> vector<4x2x128xf32>
    %c1_i32_20 = arith.constant 1 : i32
    %33 = tpu.dynamic_rotate %31 by %c1_i32_20 dim 2 : vector<4x2x128xf32>, i32 -> vector<4x2x128xf32>
    %34 = arith.select %20, %32, %33 : vector<4x2x128xi1>, vector<4x2x128xf32>
    %35 = vector.broadcast %0 : vector<4x1x128xf32> to vector<4x2x128xf32>
    %36 = arith.mulf %31, %35 : vector<4x2x128xf32>
    %37 = vector.broadcast %1 : vector<4x1x128xf32> to vector<4x2x128xf32>
    %38 = arith.mulf %34, %37 : vector<4x2x128xf32>
    %39 = arith.addf %36, %38 : vector<4x2x128xf32>
    %c0_21 = arith.constant 0 : index
    %c0_22 = arith.constant 0 : index
    %c0_23 = arith.constant 0 : index
    %40 = vector.load %arg6[%c0_21, %c0_22, %c0_23] : memref<4x2x128xf32, #tpu.memory_space<vmem>>, vector<4x2x128xf32>
    tpu.vector_store %arg6[%c0_21, %c0_22, %c0_23], %39 {strides = array<i32>} : memref<4x2x128xf32, #tpu.memory_space<vmem>>, vector<4x2x128xf32>,
    return
  }
  func.func @transform_0(%arg0: i32) -> (i32, i32, i32) {
    %c0_i32 = arith.constant 0 : i32
    %c0_i32_0 = arith.constant 0 : i32
    %c0_i32_1 = arith.constant 0 : i32
    return %arg0, %c0_i32, %c0_i32_0 : i32, i32, i32
  }
  func.func @transform_1(%arg0: i32) -> (i32, i32, i32) {
    %c0_i32 = arith.constant 0 : i32
    %c0_i32_0 = arith.constant 0 : i32
    %c0_i32_1 = arith.constant 0 : i32
    return %arg0, %c0_i32, %c0_i32_0 : i32, i32, i32
  }
  func.func @transform_2(%arg0: i32) -> (i32, i32, i32) {
    %c0_i32 = arith.constant 0 : i32
    %c0_i32_0 = arith.constant 0 : i32
    %c0_i32_1 = arith.constant 0 : i32
    return %arg0, %c0_i32, %c0_i32_0 : i32, i32, i32
  }
  func.func @transform_3(%arg0: i32) -> (i32, i32, i32) {
    %c0_i32 = arith.constant 0 : i32
    %c0_i32_0 = arith.constant 0 : i32
    %c0_i32_1 = arith.constant 0 : i32
    return %arg0, %c0_i32, %c0_i32_0 : i32, i32, i32
  }
  func.func @transform_4(%arg0: i32) -> (i32, i32, i32) {
    %c0_i32 = arith.constant 0 : i32
    %c0_i32_0 = arith.constant 0 : i32
    %c0_i32_1 = arith.constant 0 : i32
    return %arg0, %c0_i32, %c0_i32_0 : i32, i32, i32
  }
  func.func @transform_5(%arg0: i32) -> (i32, i32, i32) {
    %c0_i32 = arith.constant 0 : i32
    %c0_i32_0 = arith.constant 0 : i32
    %c0_i32_1 = arith.constant 0 : i32
    return %arg0, %c0_i32, %c0_i32_0 : i32, i32, i32
  }
}

</mosaic_0001>

<llo_original>
// kernel: tpu_custom_call.1
$region0: #{tpu_custom_call.1}
  #allocation0 [shape = 'u32[]', space=smem, size = 0x4, offset = 0x4, fixed_abs, tag = 'smem constant byte address 0x4 - core index']
  #allocation1 [shape = 'u32[144,128]{1,0:T(1,128)}', space=vmem, size = 0x12000, scoped, tag = 'internal scratch']
  %s0 = inlined_call_operand.hbm [shape: f32[8,1,128], index: 0, kind: input, shape index: {}]
  %s1 = inlined_call_operand.hbm [shape: f32[8,1,128], index: 1, kind: input, shape index: {}]
  %s2 = inlined_call_operand.hbm [shape: f32[8,2,128], index: 2, kind: input, shape index: {}]
  %s3 = inlined_call_operand.hbm [shape: f32[8,2,128], index: 3, kind: input, shape index: {}]
  %s4 = inlined_call_operand.hbm [shape: f32[8,2,128], index: 4, kind: output, shape index: {0}]
  %s5 = inlined_call_operand.hbm [shape: f32[8,2,128], index: 5, kind: output, shape index: {1}]
  %6 = xla_tuple %s4, %s5
  %s7 = sld [smem:[#allocation0]]
  $region73: #{tpu_custom_call.1} parent=0
    _
  %s9 = ssub.s32 1, %s7
  %s10 = scalar_select 0, %s9, %s7
  $region1: #{tpu_custom_call.1} parent=0
    #allocation2 [shape = 'u8[4096]{0}', space=vmem, size = 0x1000, scoped, tag = 'input window, operand 0']
    #allocation3 [shape = 's32[2]{0}', space=sflag, size = 0x8, scoped, tag = 'scoped memory for tpu_custom_call.1']
    #allocation4 [shape = 's32[2]{0}', space=sflag, size = 0x8, scoped, tag = 'scoped memory for tpu_custom_call.1']
    #allocation5 [shape = 'u8[4096]{0}', space=vmem, size = 0x1000, scoped, tag = 'input window, operand 1']
    #allocation6 [shape = 's32[2]{0}', space=sflag, size = 0x8, scoped, tag = 'scoped memory for tpu_custom_call.1']
    #allocation7 [shape = 'u8[8192]{0}', space=vmem, size = 0x2000, scoped, tag = 'input window, operand 2']
    #allocation8 [shape = 'u8[8192]{0}', space=vmem, size = 0x2000, scoped, tag = 'input window, operand 3']
    #allocation9 [shape = 's32[2]{0}', space=sflag, size = 0x8, scoped, tag = 'scoped memory for tpu_custom_call.1']
    #allocation10 [shape = 'u8[8192]{0}', space=vmem, size = 0x2000, scoped, tag = 'output window, operand 0']
    #allocation11 [shape = 'u8[8192]{0}', space=vmem, size = 0x2000, scoped, tag = 'output window, operand 1']
    #allocation12 [shape = 's32[2]{0}', space=sflag, size = 0x8, scoped, tag = 'scoped memory for tpu_custom_call.1']
    %11 = vsyncpa [#allocation3], 0
    %s12 = scalar_lea.sflag [#allocation3], 1
    %13 = vsyncpa %s12, 0
    %14 = vsyncpa [#allocation6], 0
    %s15 = scalar_lea.sflag [#allocation6], 1
    %16 = vsyncpa %s15, 0
    %17 = vsyncpa [#allocation9], 0
    %s18 = scalar_lea.sflag [#allocation9], 1
    %19 = vsyncpa %s18, 0
    %20 = vsyncpa [#allocation4], 0
    %s21 = scalar_lea.sflag [#allocation4], 1
    %22 = vsyncpa %s21, 0
    %23 = vsyncpa [#allocation12], 0
    %s24 = scalar_lea.sflag [#allocation12], 1
    %25 = vsyncpa %s24, 0
    loop: start=0, step=1, limit=4
    $region2: #{tpu_custom_call.1} parent=1 // loop_pre_header
      _
    $region3: #{tpu_custom_call.1} parent=1 // loop_header
      %s27 = sphi 0, %s31
      %p28 = scmp.ge.s32.totalorder %s27, 4
      %s37 = sphi 0, %s39
      %s40 = sphi 0, %s37
      %s41 = sphi 0, %s40
      %s57 = sphi 0, %s41
      %s63 = sphi 0, %s65
      %s66 = sphi 0, %s63
      %s67 = sphi 0, %s66
      %s83 = sphi 0, %s67
      %s89 = sphi 0, %s91
      %s92 = sphi 0, %s89
      %s93 = sphi 0, %s92
      %s109 = sphi 0, %s93
      %s115 = sphi 0, %s117
      %s118 = sphi 0, %s115
      %s119 = sphi 0, %s118
      %s135 = sphi 0, %s119
      %s141 = sphi 0, %s143
      %s144 = sphi 0, %s141
      %s145 = sphi 0, %s144
      %s161 = sphi 0, %s145
      %s167 = sphi 0, %s169
      %s170 = sphi 0, %s167
      %s171 = sphi 0, %s170
      %s187 = sphi 0, %s171
    $region4: #{tpu_custom_call.1} parent=1 // loop_header_branch
      %30 = sbr.rel (%p28) target = $region8
    $region5: #{tpu_custom_call.1} parent=1 // loop_body
      %s32 = ssub.s32 %s27, 1
      %s33 = ssub.s32 %s27, 2
      %s34 = sadd.s32 %s27, 1
      %s35 = ssub.s32 %s27, %s34
      %p36 = scmp.eq.s32.totalorder %s35, 0
      %s38 = sadd.s32 %s37, 1
      %s39 = scalar_select %p36, %s37, %s38
      %p42 = pneg %p36
      %p43 = scmp.eq.s32.totalorder %s27, 1
      %p44 = por %p42, %p43
      %p45 = scmp.ne.s32.totalorder %s37, %s40
      %p46 = scmp.eq.s32.totalorder %s27, 0
      %p47 = por %p45, %p46
      %p48 = scmp.ne.s32.totalorder %s37, %s40
      %p49 = scmp.eq.s32.totalorder %s32, 1
      %p50 = por %p48, %p49
      %p51 = scmp.ne.s32.totalorder %s40, %s41
      %p52 = scmp.eq.s32.totalorder %s32, 0
      %p53 = por %p51, %p52
      %p54 = scmp.ne.s32.totalorder %s40, %s41
      %p55 = scmp.eq.s32.totalorder %s33, 1
      %p56 = por %p54, %p55
      %p58 = scmp.ne.s32.totalorder %s41, %s57
      %p59 = scmp.eq.s32.totalorder %s33, 0
      %p60 = por %p58, %p59
      %s61 = ssub.s32 %s27, %s34
      %p62 = scmp.eq.s32.totalorder %s61, 0
      %s64 = sadd.s32 %s63, 1
      %s65 = scalar_select %p62, %s63, %s64
      %p68 = pneg %p62
      %p69 = scmp.eq.s32.totalorder %s27, 1
      %p70 = por %p68, %p69
      %p71 = scmp.ne.s32.totalorder %s63, %s66
      %p72 = scmp.eq.s32.totalorder %s27, 0
      %p73 = por %p71, %p72
      %p74 = scmp.ne.s32.totalorder %s63, %s66
      %p75 = scmp.eq.s32.totalorder %s32, 1
      %p76 = por %p74, %p75
      %p77 = scmp.ne.s32.totalorder %s66, %s67
      %p78 = scmp.eq.s32.totalorder %s32, 0
      %p79 = por %p77, %p78
      %p80 = scmp.ne.s32.totalorder %s66, %s67
      %p81 = scmp.eq.s32.totalorder %s33, 1
      %p82 = por %p80, %p81
      %p84 = scmp.ne.s32.totalorder %s67, %s83
      %p85 = scmp.eq.s32.totalorder %s33, 0
      %p86 = por %p84, %p85
      %s87 = ssub.s32 %s27, %s34
      %p88 = scmp.eq.s32.totalorder %s87, 0
      %s90 = sadd.s32 %s89, 1
      %s91 = scalar_select %p88, %s89, %s90
      %p94 = pneg %p88
      %p95 = scmp.eq.s32.totalorder %s27, 1
      %p96 = por %p94, %p95
      %p97 = scmp.ne.s32.totalorder %s89, %s92
      %p98 = scmp.eq.s32.totalorder %s27, 0
      %p99 = por %p97, %p98
      %p100 = scmp.ne.s32.totalorder %s89, %s92
      %p101 = scmp.eq.s32.totalorder %s32, 1
      %p102 = por %p100, %p101
      %p103 = scmp.ne.s32.totalorder %s92, %s93
      %p104 = scmp.eq.s32.totalorder %s32, 0
      %p105 = por %p103, %p104
      %p106 = scmp.ne.s32.totalorder %s92, %s93
      %p107 = scmp.eq.s32.totalorder %s33, 1
      %p108 = por %p106, %p107
      %p110 = scmp.ne.s32.totalorder %s93, %s109
      %p111 = scmp.eq.s32.totalorder %s33, 0
      %p112 = por %p110, %p111
      %s113 = ssub.s32 %s27, %s34
      %p114 = scmp.eq.s32.totalorder %s113, 0
      %s116 = sadd.s32 %s115, 1
      %s117 = scalar_select %p114, %s115, %s116
      %p120 = pneg %p114
      %p121 = scmp.eq.s32.totalorder %s27, 1
      %p122 = por %p120, %p121
      %p123 = scmp.ne.s32.totalorder %s115, %s118
      %p124 = scmp.eq.s32.totalorder %s27, 0
      %p125 = por %p123, %p124
      %p126 = scmp.ne.s32.totalorder %s115, %s118
      %p127 = scmp.eq.s32.totalorder %s32, 1
      %p128 = por %p126, %p127
      %p129 = scmp.ne.s32.totalorder %s118, %s119
      %p130 = scmp.eq.s32.totalorder %s32, 0
      %p131 = por %p129, %p130
      %p132 = scmp.ne.s32.totalorder %s118, %s119
      %p133 = scmp.eq.s32.totalorder %s33, 1
      %p134 = por %p132, %p133
      %p136 = scmp.ne.s32.totalorder %s119, %s135
      %p137 = scmp.eq.s32.totalorder %s33, 0
      %p138 = por %p136, %p137
      %s139 = ssub.s32 %s27, %s34
      %p140 = scmp.eq.s32.totalorder %s139, 0
      %s142 = sadd.s32 %s141, 1
      %s143 = scalar_select %p140, %s141, %s142
      %p146 = pneg %p140
      %p147 = scmp.eq.s32.totalorder %s27, 1
      %p148 = por %p146, %p147
      %p149 = scmp.ne.s32.totalorder %s141, %s144
      %p150 = scmp.eq.s32.totalorder %s27, 0
      %p151 = por %p149, %p150
      %p152 = scmp.ne.s32.totalorder %s141, %s144
      %p153 = scmp.eq.s32.totalorder %s32, 1
      %p154 = por %p152, %p153
      %p155 = scmp.ne.s32.totalorder %s144, %s145
      %p156 = scmp.eq.s32.totalorder %s32, 0
      %p157 = por %p155, %p156
      %p158 = scmp.ne.s32.totalorder %s144, %s145
      %p159 = scmp.eq.s32.totalorder %s33, 1
      %p160 = por %p158, %p159
      %p162 = scmp.ne.s32.totalorder %s145, %s161
      %p163 = scmp.eq.s32.totalorder %s33, 0
      %p164 = por %p162, %p163
      %s165 = ssub.s32 %s27, %s34
      %p166 = scmp.eq.s32.totalorder %s165, 0
      %s168 = sadd.s32 %s167, 1
      %s169 = scalar_select %p166, %s167, %s168
      %p172 = pneg %p166
      %p173 = scmp.eq.s32.totalorder %s27, 1
      %p174 = por %p172, %p173
      %p175 = scmp.ne.s32.totalorder %s167, %s170
      %p176 = scmp.eq.s32.totalorder %s27, 0
      %p177 = por %p175, %p176
      %p178 = scmp.ne.s32.totalorder %s167, %s170
      %p179 = scmp.eq.s32.totalorder %s32, 1
      %p180 = por %p178, %p179
      %p181 = scmp.ne.s32.totalorder %s170, %s171
      %p182 = scmp.eq.s32.totalorder %s32, 0
      %p183 = por %p181, %p182
      %p184 = scmp.ne.s32.totalorder %s170, %s171
      %p185 = scmp.eq.s32.totalorder %s33, 1
      %p186 = por %p184, %p185
      %p188 = scmp.ne.s32.totalorder %s171, %s187
      %p189 = scmp.eq.s32.totalorder %s33, 0
      %p190 = por %p188, %p189
      %p191 = scmp.le.s32.totalorder 1, %s27
      %p192 = scmp.lt.s32.totalorder %s27, 3
      %p193 = pnand %p191, %p192
      %p194 = pneg %p193
      // Predicated region
      $region9: #{tpu_custom_call.1} parent=5 // pred_check
        _
      $region10: #{tpu_custom_call.1} parent=5 // pred_check_branch
        %196 = sbr.rel (%p193) target = $region12
      $region11: #{tpu_custom_call.1} parent=5 // pred_region
        %s197 = ssub.s32 %s27, 1
      $region12: #{tpu_custom_call.1} parent=5 // pred_fallthru
        _
      %p198 = scmp.lt.s32.totalorder %s27, 2
      // Predicated region
      $region13: #{tpu_custom_call.1} parent=5 // pred_check
        %p199 = pneg %p198
      $region14: #{tpu_custom_call.1} parent=5 // pred_check_branch
        %201 = sbr.rel (%p199) target = $region16
      $region15: #{tpu_custom_call.1} parent=5 // pred_region
        // Predicated region
        $region17: #{tpu_custom_call.1} parent=15 // pred_check
          %p202 = pneg %p47
        $region18: #{tpu_custom_call.1} parent=15 // pred_check_branch
          %204 = sbr.rel (%p202) target = $region20
        $region19: #{tpu_custom_call.1} parent=15 // pred_region
          %s205 = sand.u32 %s37, 1
          %s206 = scalar_lea.sflag [#allocation3], %s205
          %s207 = sand.u32 %s37, 1
          %s208 = smul.addr %s207, 4
          %s209 = scalar_lea.vmem [#allocation2], %s208
          %s210 = smul.u32 4, %s27
          %s212 = ssub.s32 64, 64
          %213 = vsyncadd %s206, %s212
          %s214 = smul.addr %s210, 16
          %s215 = scalar_lea.hbm %s0, %s214
          %s216 = sshll.u32 %s209, 4
          %s217 = int_to_ptr.vmem [resolvable:$true] %s216
          %222 = dma.hbm_to_vmem [thread:$0]  %s215, 64, %s217, %s206, 16, 16, 1
        $region20: #{tpu_custom_call.1} parent=15 // pred_fallthru
          _
        // Predicated region
        $region21: #{tpu_custom_call.1} parent=15 // pred_check
          %p223 = pneg %p73
        $region22: #{tpu_custom_call.1} parent=15 // pred_check_branch
          %225 = sbr.rel (%p223) target = $region24
        $region23: #{tpu_custom_call.1} parent=15 // pred_region
          %s226 = sand.u32 %s27, 1
          %s227 = scalar_lea.sflag [#allocation6], %s226
          %s228 = sand.u32 %s63, 1
          %s229 = smul.addr %s228, 4
          %s230 = scalar_lea.vmem [#allocation5], %s229
          %s231 = smul.u32 4, %s27
          %s233 = ssub.s32 64, 64
          %234 = vsyncadd %s227, %s233
          %s235 = smul.addr %s231, 16
          %s236 = scalar_lea.hbm %s1, %s235
          %s237 = sshll.u32 %s230, 4
          %s238 = int_to_ptr.vmem [resolvable:$true] %s237
          %243 = dma.hbm_to_vmem [thread:$0]  %s236, 64, %s238, %s227, 16, 16, 1
        $region24: #{tpu_custom_call.1} parent=15 // pred_fallthru
          _
        // Predicated region
        $region25: #{tpu_custom_call.1} parent=15 // pred_check
          %p244 = pneg %p99
        $region26: #{tpu_custom_call.1} parent=15 // pred_check_branch
          %246 = sbr.rel (%p244) target = $region28
        $region27: #{tpu_custom_call.1} parent=15 // pred_region
          %s247 = sand.u32 %s27, 1
          %s248 = scalar_lea.sflag [#allocation6], %s247
          %s249 = sand.u32 %s89, 1
          %s250 = smul.addr %s249, 8
          %s251 = scalar_lea.vmem [#allocation7], %s250
          %s252 = smul.u32 4, %s27
          %s254 = ssub.s32 128, 128
          %255 = vsyncadd %s248, %s254
          %s256 = smul.addr %s252, 32
          %s257 = scalar_lea.hbm %s2, %s256
          %s258 = sshll.u32 %s251, 4
          %s259 = int_to_ptr.vmem [resolvable:$true] %s258
          %264 = dma.hbm_to_vmem [thread:$0]  %s257, 128, %s259, %s248, 32, 32, 2
        $region28: #{tpu_custom_call.1} parent=15 // pred_fallthru
          _
        // Predicated region
        $region29: #{tpu_custom_call.1} parent=15 // pred_check
          %p265 = pneg %p125
        $region30: #{tpu_custom_call.1} parent=15 // pred_check_branch
          %267 = sbr.rel (%p265) target = $region32
        $region31: #{tpu_custom_call.1} parent=15 // pred_region
          %s268 = sand.u32 %s115, 1
          %s269 = scalar_lea.sflag [#allocation9], %s268
          %s270 = sand.u32 %s115, 1
          %s271 = smul.addr %s270, 8
          %s272 = scalar_lea.vmem [#allocation8], %s271
          %s273 = smul.u32 4, %s27
          %s275 = ssub.s32 128, 128
          %276 = vsyncadd %s269, %s275
          %s277 = smul.addr %s273, 32
          %s278 = scalar_lea.hbm %s3, %s277
          %s279 = sshll.u32 %s272, 4
          %s280 = int_to_ptr.vmem [resolvable:$true] %s279
          %285 = dma.hbm_to_vmem [thread:$0]  %s278, 128, %s280, %s269, 32, 32, 2
        $region32: #{tpu_custom_call.1} parent=15 // pred_fallthru
          _
      $region16: #{tpu_custom_call.1} parent=5 // pred_fallthru
        _
      %p286 = scmp.le.s32.totalorder 1, %s27
      %p287 = scmp.lt.s32.totalorder %s27, 3
      %p288 = pnand %p286, %p287
      %p289 = pneg %p288
      // Predicated region
      $region33: #{tpu_custom_call.1} parent=5 // pred_check
        _
      $region34: #{tpu_custom_call.1} parent=5 // pred_check_branch
        %291 = sbr.rel (%p288) target = $region36
      $region35: #{tpu_custom_call.1} parent=5 // pred_region
        %s292 = ssub.s32 %s27, 1
        %s293 = sand.u32 %s40, 1
        %s294 = scalar_lea.sflag [#allocation3], %s293
        %s295 = sand.u32 %s40, 1
        %s296 = smul.addr %s295, 4
        %s297 = scalar_lea.vmem [#allocation2], %s296
        // Predicated region
        $region37: #{tpu_custom_call.1} parent=35 // pred_check
          %p298 = pneg %p53
        $region38: #{tpu_custom_call.1} parent=35 // pred_check_branch
          %300 = sbr.rel (%p298) target = $region40
        $region39: #{tpu_custom_call.1} parent=35 // pred_region
          %301 = dma.done %s294, 64
        $region40: #{tpu_custom_call.1} parent=35 // pred_fallthru
          _
        %s302 = sand.u32 %s32, 1
        %s303 = scalar_lea.sflag [#allocation6], %s302
        %s304 = sand.u32 %s66, 1
        %s305 = smul.addr %s304, 4
        %s306 = scalar_lea.vmem [#allocation5], %s305
        // Predicated region
        $region41: #{tpu_custom_call.1} parent=35 // pred_check
          %p307 = pneg %p79
        $region42: #{tpu_custom_call.1} parent=35 // pred_check_branch
          %309 = sbr.rel (%p307) target = $region44
        $region43: #{tpu_custom_call.1} parent=35 // pred_region
          %310 = dma.done %s303, 64
        $region44: #{tpu_custom_call.1} parent=35 // pred_fallthru
          _
        %s311 = sand.u32 %s32, 1
        %s312 = scalar_lea.sflag [#allocation6], %s311
        %s313 = sand.u32 %s92, 1
        %s314 = smul.addr %s313, 8
        %s315 = scalar_lea.vmem [#allocation7], %s314
        // Predicated region
        $region45: #{tpu_custom_call.1} parent=35 // pred_check
          %p316 = pneg %p105
        $region46: #{tpu_custom_call.1} parent=35 // pred_check_branch
          %318 = sbr.rel (%p316) target = $region48
        $region47: #{tpu_custom_call.1} parent=35 // pred_region
          %319 = dma.done %s312, 128
        $region48: #{tpu_custom_call.1} parent=35 // pred_fallthru
          _
        %s320 = sand.u32 %s118, 1
        %s321 = scalar_lea.sflag [#allocation9], %s320
        %s322 = sand.u32 %s118, 1
        %s323 = smul.addr %s322, 8
        %s324 = scalar_lea.vmem [#allocation8], %s323
        // Predicated region
        $region49: #{tpu_custom_call.1} parent=35 // pred_check
          %p325 = pneg %p131
        $region50: #{tpu_custom_call.1} parent=35 // pred_check_branch
          %327 = sbr.rel (%p325) target = $region52
        $region51: #{tpu_custom_call.1} parent=35 // pred_region
          %328 = dma.done %s321, 128
        $region52: #{tpu_custom_call.1} parent=35 // pred_fallthru
          _
        %s329 = sand.u32 %s40, 1
        %s330 = scalar_lea.sflag [#allocation3], %s329
        %s331 = sand.u32 %s40, 1
        %s332 = smul.addr %s331, 4
        %s333 = scalar_lea.vmem [#allocation2], %s332
        %p334 = pneg %p53
        %p335 = pneg %p50
        %s336 = sand.u32 %s32, 1
        %s337 = scalar_lea.sflag [#allocation6], %s336
        %s338 = sand.u32 %s66, 1
        %s339 = smul.addr %s338, 4
        %s340 = scalar_lea.vmem [#allocation5], %s339
        %p341 = pneg %p79
        %p342 = pneg %p76
        %s343 = sand.u32 %s32, 1
        %s344 = scalar_lea.sflag [#allocation6], %s343
        %s345 = sand.u32 %s92, 1
        %s346 = smul.addr %s345, 8
        %s347 = scalar_lea.vmem [#allocation7], %s346
        %p348 = pneg %p105
        %p349 = pneg %p102
        %s350 = sand.u32 %s118, 1
        %s351 = scalar_lea.sflag [#allocation9], %s350
        %s352 = sand.u32 %s118, 1
        %s353 = smul.addr %s352, 8
        %s354 = scalar_lea.vmem [#allocation8], %s353
        %p355 = pneg %p131
        %p356 = pneg %p128
        %p357 = pneg %p157
        %p358 = pneg %p154
        %s359 = sand.u32 %s144, 1
        %s360 = scalar_lea.sflag [#allocation4], %s359
        %s361 = sand.u32 %s144, 1
        %s362 = smul.addr %s361, 8
        %s363 = scalar_lea.vmem [#allocation10], %s362
        %p364 = pneg %p183
        %p365 = pneg %p180
        %s366 = sand.u32 %s170, 1
        %s367 = scalar_lea.sflag [#allocation12], %s366
        %s368 = sand.u32 %s170, 1
        %s369 = smul.addr %s368, 8
        %s370 = scalar_lea.vmem [#allocation11], %s369
        %s371 = smul.u32 4, %s32
        %s372 = smul.u32 4, %s32
        %s373 = smul.u32 4, %s32
        %s374 = smul.u32 4, %s32
        %s375 = smul.u32 4, %s32
        %s376 = smul.u32 4, %s32
        %v377 = vld [vmem:[%s297] sm:$0x1]
        %v378 = vld [vmem:[%s297 + $0x1] sm:$0x1]
        %v379 = vld [vmem:[%s297 + $0x2] sm:$0x1]
        %v380 = vld [vmem:[%s297 + $0x3] sm:$0x1]
        %v381 = vld [vmem:[%s306] sm:$0x1]
        %v382 = vld [vmem:[%s306 + $0x1] sm:$0x1]
        %v383 = vld [vmem:[%s306 + $0x2] sm:$0x1]
        %v384 = vld [vmem:[%s306 + $0x3] sm:$0x1]
        %v385 = vlaneseq
        %v386 = vand.u32 %v385, 127
        %vm387 = vcmp.lt.s32.totalorder %v386, 0
        %v388 = vsub.s32 0, %v386
        %v389 = vsel %vm387, %v388, %v386
        %v390 = vshrl.u32 %v389, 1
        %v391 = vand.u32 %v389, 1
        %v392 = vsub.s32 0, %v391
        %v393 = vsel %vm387, %v392, %v391
        %vm394 = vcmp.ne.s32.totalorder %v393, 0
        %vm395 = vcmp.lt.s32.totalorder %v393, 0
        %vm396 = vmand %vm395, %vm394
        %v397 = vadd.s32 %v393, 2
        %v398 = vsel %vm396, %v397, %v393
        %vm399 = vcmp.eq.s32.totalorder %v398, 0
        %v400 = vld [vmem:[%s315] sm:$0x3]
        %v401 = vld [vmem:[%s315 + $0x2] sm:$0x3]
        %v402 = vld [vmem:[%s315 + $0x4] sm:$0x3]
        %v403 = vld [vmem:[%s315 + $0x6] sm:$0x3]
        %404 = vrot.lane.b32.xlu0 %v400, 127
        %v405 = vpop.permute.xlu0 %404
        %406 = vrot.lane.b32.xlu0 %v401, 127
        %v407 = vpop.permute.xlu0 %406
        %408 = vrot.lane.b32.xlu0 %v402, 127
        %v409 = vpop.permute.xlu0 %408
        %410 = vrot.lane.b32.xlu0 %v403, 127
        %v411 = vpop.permute.xlu0 %410
        %412 = vrot.lane.b32.xlu0 %v400, 1
        %v413 = vpop.permute.xlu0 %412
        %414 = vrot.lane.b32.xlu0 %v401, 1
        %v415 = vpop.permute.xlu0 %414
        %416 = vrot.lane.b32.xlu0 %v402, 1
        %v417 = vpop.permute.xlu0 %416
        %418 = vrot.lane.b32.xlu0 %v403, 1
        %v419 = vpop.permute.xlu0 %418
        %v420 = vsel %vm399, %v405, %v413
        %v421 = vsel %vm399, %v407, %v415
        %v422 = vsel %vm399, %v409, %v417
        %v423 = vsel %vm399, %v411, %v419
        %v428 = vlaneseq
        %v429 = vshrl.u32 %v428, 7
        %v430 = vsub.s32 0, %v429
        %v431 = vrot.slane %v377, %v430
        %v432 = vlaneseq
        %v433 = vshrl.u32 %v432, 7
        %v434 = vsub.s32 0, %v433
        %v435 = vrot.slane %v378, %v434
        %v436 = vlaneseq
        %v437 = vshrl.u32 %v436, 7
        %v438 = vsub.s32 0, %v437
        %v439 = vrot.slane %v379, %v438
        %v440 = vlaneseq
        %v441 = vshrl.u32 %v440, 7
        %v442 = vsub.s32 0, %v441
        %v443 = vrot.slane %v380, %v442
        %v448 = vmul.f32 %v400, %v431
        %v449 = vmul.f32 %v401, %v435
        %v450 = vmul.f32 %v402, %v439
        %v451 = vmul.f32 %v403, %v443
        %v456 = vlaneseq
        %v457 = vshrl.u32 %v456, 7
        %v458 = vsub.s32 0, %v457
        %v459 = vrot.slane %v381, %v458
        %v460 = vlaneseq
        %v461 = vshrl.u32 %v460, 7
        %v462 = vsub.s32 0, %v461
        %v463 = vrot.slane %v382, %v462
        %v464 = vlaneseq
        %v465 = vshrl.u32 %v464, 7
        %v466 = vsub.s32 0, %v465
        %v467 = vrot.slane %v383, %v466
        %v468 = vlaneseq
        %v469 = vshrl.u32 %v468, 7
        %v470 = vsub.s32 0, %v469
        %v471 = vrot.slane %v384, %v470
        %v476 = vmul.f32 %v420, %v459
        %v477 = vmul.f32 %v421, %v463
        %v478 = vmul.f32 %v422, %v467
        %v479 = vmul.f32 %v423, %v471
        %v480 = vadd.f32 %v448, %v476
        %v481 = vadd.f32 %v449, %v477
        %v482 = vadd.f32 %v450, %v478
        %v483 = vadd.f32 %v451, %v479
        %484 = vst [vmem:[%s363] sm:$0x3] %v480
        %485 = vst [vmem:[%s363 + $0x2] sm:$0x3] %v481
        %486 = vst [vmem:[%s363 + $0x4] sm:$0x3] %v482
        %487 = vst [vmem:[%s363 + $0x6] sm:$0x3] %v483
        %v488 = vld [vmem:[%s324] sm:$0x3]
        %v489 = vld [vmem:[%s324 + $0x2] sm:$0x3]
        %v490 = vld [vmem:[%s324 + $0x4] sm:$0x3]
        %v491 = vld [vmem:[%s324 + $0x6] sm:$0x3]
        %492 = vrot.lane.b32.xlu0 %v488, 127
        %v493 = vpop.permute.xlu0 %492
        %494 = vrot.lane.b32.xlu0 %v489, 127
        %v495 = vpop.permute.xlu0 %494
        %496 = vrot.lane.b32.xlu0 %v490, 127
        %v497 = vpop.permute.xlu0 %496
        %498 = vrot.lane.b32.xlu0 %v491, 127
        %v499 = vpop.permute.xlu0 %498
        %500 = vrot.lane.b32.xlu0 %v488, 1
        %v501 = vpop.permute.xlu0 %500
        %502 = vrot.lane.b32.xlu0 %v489, 1
        %v503 = vpop.permute.xlu0 %502
        %504 = vrot.lane.b32.xlu0 %v490, 1
        %v505 = vpop.permute.xlu0 %504
        %506 = vrot.lane.b32.xlu0 %v491, 1
        %v507 = vpop.permute.xlu0 %506
        %v508 = vsel %vm399, %v493, %v501
        %v509 = vsel %vm399, %v495, %v503
        %v510 = vsel %vm399, %v497, %v505
        %v511 = vsel %vm399, %v499, %v507
        %v512 = vmul.f32 %v488, %v431
        %v513 = vmul.f32 %v489, %v435
        %v514 = vmul.f32 %v490, %v439
        %v515 = vmul.f32 %v491, %v443
        %v516 = vmul.f32 %v508, %v459
        %v517 = vmul.f32 %v509, %v463
        %v518 = vmul.f32 %v510, %v467
        %v519 = vmul.f32 %v511, %v471
        %v520 = vadd.f32 %v512, %v516
        %v521 = vadd.f32 %v513, %v517
        %v522 = vadd.f32 %v514, %v518
        %v523 = vadd.f32 %v515, %v519
        %524 = vst [vmem:[%s370] sm:$0x3] %v520
        %525 = vst [vmem:[%s370 + $0x2] sm:$0x3] %v521
        %526 = vst [vmem:[%s370 + $0x4] sm:$0x3] %v522
        %527 = vst [vmem:[%s370 + $0x6] sm:$0x3] %v523
        %s528 = sand.u32 %s144, 1
        %s529 = scalar_lea.sflag [#allocation4], %s528
        %s530 = sand.u32 %s144, 1
        %s531 = smul.addr %s530, 8
        %s532 = scalar_lea.vmem [#allocation10], %s531
        %s533 = sand.u32 %s170, 1
        %s534 = scalar_lea.sflag [#allocation12], %s533
        %s535 = sand.u32 %s170, 1
        %s536 = smul.addr %s535, 8
        %s537 = scalar_lea.vmem [#allocation11], %s536
        // Predicated region
        $region53: #{tpu_custom_call.1} parent=35 // pred_check
          %p538 = pneg %p154
        $region54: #{tpu_custom_call.1} parent=35 // pred_check_branch
          %540 = sbr.rel (%p538) target = $region56
        $region55: #{tpu_custom_call.1} parent=35 // pred_region
          %s541 = smul.u32 4, %s32
          %s543 = ssub.s32 128, 128
          %544 = vsyncadd %s529, %s543
          %s545 = smul.addr %s541, 32
          %s546 = scalar_lea.hbm %s4, %s545
          %s547 = sshll.u32 %s532, 4
          %s548 = int_to_ptr.vmem [resolvable:$true] %s547
          %553 = dma.vmem_to_hbm [thread:$0]  %s548, 128, %s546, %s529, 32, 32, 2
        $region56: #{tpu_custom_call.1} parent=35 // pred_fallthru
          _
        // Predicated region
        $region57: #{tpu_custom_call.1} parent=35 // pred_check
          %p554 = pneg %p180
        $region58: #{tpu_custom_call.1} parent=35 // pred_check_branch
          %556 = sbr.rel (%p554) target = $region60
        $region59: #{tpu_custom_call.1} parent=35 // pred_region
          %s557 = smul.u32 4, %s32
          %s559 = ssub.s32 128, 128
          %560 = vsyncadd %s534, %s559
          %s561 = smul.addr %s557, 32
          %s562 = scalar_lea.hbm %s5, %s561
          %s563 = sshll.u32 %s537, 4
          %s564 = int_to_ptr.vmem [resolvable:$true] %s563
          %569 = dma.vmem_to_hbm [thread:$0]  %s564, 128, %s562, %s534, 32, 32, 2
        $region60: #{tpu_custom_call.1} parent=35 // pred_fallthru
          _
      $region36: #{tpu_custom_call.1} parent=5 // pred_fallthru
        _
      %p570 = scmp.le.s32.totalorder 2, %s27
      // Predicated region
      $region61: #{tpu_custom_call.1} parent=5 // pred_check
        %p571 = pneg %p570
      $region62: #{tpu_custom_call.1} parent=5 // pred_check_branch
        %573 = sbr.rel (%p571) target = $region64
      $region63: #{tpu_custom_call.1} parent=5 // pred_region
        %s574 = ssub.s32 %s27, 2
        // Predicated region
        $region65: #{tpu_custom_call.1} parent=63 // pred_check
          %p575 = pneg %p160
        $region66: #{tpu_custom_call.1} parent=63 // pred_check_branch
          %577 = sbr.rel (%p575) target = $region68
        $region67: #{tpu_custom_call.1} parent=63 // pred_region
          %s578 = sand.u32 %s145, 1
          %s579 = scalar_lea.sflag [#allocation4], %s578
          %s580 = sand.u32 %s145, 1
          %s581 = smul.addr %s580, 8
          %s582 = scalar_lea.vmem [#allocation10], %s581
          %583 = dma.done %s579, 128
        $region68: #{tpu_custom_call.1} parent=63 // pred_fallthru
          _
        // Predicated region
        $region69: #{tpu_custom_call.1} parent=63 // pred_check
          %p584 = pneg %p186
        $region70: #{tpu_custom_call.1} parent=63 // pred_check_branch
          %586 = sbr.rel (%p584) target = $region72
        $region71: #{tpu_custom_call.1} parent=63 // pred_region
          %s587 = sand.u32 %s171, 1
          %s588 = scalar_lea.sflag [#allocation12], %s587
          %s589 = sand.u32 %s171, 1
          %s590 = smul.addr %s589, 8
          %s591 = scalar_lea.vmem [#allocation11], %s590
          %592 = dma.done %s588, 128
        $region72: #{tpu_custom_call.1} parent=63 // pred_fallthru
          _
      $region64: #{tpu_custom_call.1} parent=5 // pred_fallthru
        _
    $region6: #{tpu_custom_call.1} parent=1 // loop_footer
      %s31 = sadd.s32 1, %s27
    $region7: #{tpu_custom_call.1} parent=1 // loop_footer_branch
      %26 = sbr.rel target = $region3
    $region8: #{tpu_custom_call.1} parent=1 // loop_exit
      _
    %593 = vsyncpa [#allocation3], 1
    %s594 = scalar_lea.sflag [#allocation3], 1
    %595 = vsyncpa %s594, 1
    %596 = vsyncpa [#allocation6], 1
    %s597 = scalar_lea.sflag [#allocation6], 1
    %598 = vsyncpa %s597, 1
    %599 = vsyncpa [#allocation9], 1
    %s600 = scalar_lea.sflag [#allocation9], 1
    %601 = vsyncpa %s600, 1
    %602 = vsyncpa [#allocation4], 1
    %s603 = scalar_lea.sflag [#allocation4], 1
    %604 = vsyncpa %s603, 1
    %605 = vsyncpa [#allocation12], 1
    %s606 = scalar_lea.sflag [#allocation12], 1
    %607 = vsyncpa %s606, 1

</llo_original>
